<compile_context>
chip_gen: v7x
topology: tpu7x:2x2x1
jax: 0.10.0
libtpu: 0.0.40
codegen_flags: <defaults>
</compile_context>

<pallas_src>
import functools

import jax
import jax.numpy as jnp
from jax.experimental import pallas as pl
from jax.experimental.pallas import tpu as pltpu

NEG_INF = -1e30  # stand-in for float('-inf') used by the torch code's running max


def _round_up(x, m):
    return ((x + m - 1) // m) * m


def _cdiv(a, b):
    return -(-a // b)


def _reader_max_kernel(e_ref, sid_ref, gid_ref, w1a_ref, mproj_ref, w2_ref, b2_ref,
                       emax_ref):
    """Score one tile of entity occurrences and fold into the per-group running max.

    Grid = (num_chunks [parallel], tiles_per_chunk [arbitrary]).

    e_ref    : [TILE_N, H]        entity-token embeddings
    sid_ref  : [TILE_N, 1] i32    owning-sentence id per occurrence
    gid_ref  : [TILE_N, 1] i32    unique-entity id per occurrence; -1 for pad rows
    w1a_ref  : [H, D1p]           linear.weight.T[:H]  (zero-padded to 128 cols)
    mproj_ref: [S_pad, D1p] f32   per-sentence (mask_row @ W1[H:] + b1), zero-padded
    w2_ref   : [1, D1p]           linear2.weight as a row (zero-padded)
    b2_ref   : [1, 1]
    emax_ref : [1, 1, G_pad]      resident accumulator: max score per unique entity
    """
    i = pl.program_id(1)
    tile_n = e_ref.shape[0]
    s_pad = mproj_ref.shape[0]
    g_pad = emax_ref.shape[-1]

    @pl.when(i == 0)
    def _init():
        emax_ref[...] = jnp.full(emax_ref.shape, NEG_INF, dtype=emax_ref.dtype)

    # Entity half of concat([e, m]) @ W1 on the MXU (f32 accumulation).
    h = jnp.dot(e_ref[...], w1a_ref[...], preferred_element_type=jnp.float32)

    # Mask half (+ b1): one-hot row-select of the precomputed per-sentence projection.
    # Exactly one 1.0 per row -> exact selection; uses the otherwise half-idle MXU.
    sid = sid_ref[...]                                                  # [TILE_N, 1]
    one_hot = (jax.lax.broadcasted_iota(jnp.int32, (tile_n, s_pad), 1)
               == sid).astype(jnp.float32)                              # [TILE_N, S_pad]
    h = h + jnp.dot(one_hot, mproj_ref[...], preferred_element_type=jnp.float32)
    h = jnp.maximum(h, 0.0)                                             # ReLU (f32, VPU)

    # linear2 (D1p -> 1) as VPU multiply + XLU lane reduce instead of a 1-col matmul.
    s = jnp.sum(h * w2_ref[...], axis=-1, keepdims=True) + b2_ref[...]  # [TILE_N, 1]

    # Per-unique-entity max.  Pad rows carry gid == -1 and never match the iota.
    # TODO(synk): if num_groups >> 128, tile G with a third grid axis (or pre-sort by
    # gid) instead of this O(TILE_N x G_pad) compare/select.
    gid = gid_ref[...]                                                  # [TILE_N, 1]
    lane_group = jax.lax.broadcasted_iota(jnp.int32, (tile_n, g_pad), 1)
    masked = jnp.where(lane_group == gid, s, NEG_INF)                   # [TILE_N, G_pad]
    tile_max = jnp.max(masked, axis=0, keepdims=True)                   # [1, G_pad]
    emax_ref[...] = jnp.maximum(emax_ref[...], tile_max.reshape(1, 1, g_pad))


def scibert_reader_max(bert_out, sent_ids, tok_ids, mask_pos, group_ids, num_groups,
                       w1, b1, w2, b2, *, tile_n=512, num_chunks=None,
                       input_dtype=jnp.bfloat16):
    """Score every @entity occurrence and return the per-unique-entity max.

    bert_out : [S, L, H] f32   last-layer contextual embeddings (frozen BERT output).
    sent_ids : [N] int         owning sentence of each occurrence.
    tok_ids  : [N] int         token position of each occurrence.
    mask_pos : [S] int         [MASK] position per sentence.
    group_ids: [N] int         unique-entity id per occurrence, in [0, num_groups).
    Returns  : [num_groups] f32 max score per unique entity (NEG_INF for groups with no
               occurrence — stand-in for torch's float('-inf') seed).
    """
    S, L, H = bert_out.shape
    n = sent_ids.shape[0]
    d1 = w1.shape[1]
    assert w1.shape[0] == 2 * H

    if num_chunks is None:
        # v7x has 2 TensorCores/chip; on single-TC v5e/v6e a chunk split is only a
        # serial loop (measured parallel-vs-arbitrary delta ~0), so keep 1 there.
        try:
            kind = jax.devices()[0].device_kind.lower()
        except Exception:
            kind = ""
        num_chunks = 2 if "v7" in kind else 1

    # Lane/sublane-aligned padded sizes.
    d1_pad = _round_up(d1, 128)
    g_pad = _round_up(max(num_groups, 1), 128)
    s_pad = _round_up(max(S, 1), 128)            # one-hot contraction dim (tiny anyway)
    tile_n = int(max(8, min(tile_n, _round_up(_cdiv(max(n, 1), num_chunks), 8))))
    tiles_per_chunk = max(1, _cdiv(n, num_chunks * tile_n))
    n_pad = num_chunks * tiles_per_chunk * tile_n

    # Weights.  Padding is exact: padded D1 columns give relu(0) * 0 = 0.
    w1a = jnp.zeros((H, d1_pad), jnp.float32).at[:, :d1].set(w1[:H]).astype(input_dtype)
    w2row = jnp.zeros((1, d1_pad), jnp.float32).at[0, :d1].set(w2[:, 0])
    b2p = b2.reshape(1, 1).astype(jnp.float32)

    # Per-sentence [MASK] projection (mask_rows @ W1[H:] + b1), computed once in f32
    # (S << N) and kept VMEM-resident.  Replaces streaming the [N, H] mask broadcast
    # and the per-occurrence m @ W1b matmul.
    mask_rows = bert_out[jnp.arange(S), mask_pos, :]                           # [S, H]
    mproj_small = jnp.dot(mask_rows, w1[H:],
                          precision=jax.lax.Precision.HIGHEST) + b1            # [S, D1]
    mproj = jnp.zeros((s_pad, d1_pad), jnp.float32).at[:S, :d1].set(mproj_small)

    # Pad only the tiny int32 index arrays; gather the entity rows straight out of
    # bert_out in a single pass (no extra zero-pad round trip of the big activation
    # matrix).  Pad rows point at (sent 0, tok 0) but carry gid = -1 -> excluded.
    sid_p = jnp.zeros((n_pad,), jnp.int32).at[:n].set(sent_ids.astype(jnp.int32))
    tid_p = jnp.zeros((n_pad,), jnp.int32).at[:n].set(tok_ids.astype(jnp.int32))
    gid_p = jnp.full((n_pad,), -1, jnp.int32).at[:n].set(group_ids.astype(jnp.int32))
    e_p = bert_out[sid_p, tid_p, :].astype(input_dtype)                        # [n_pad, H]

    tpc = tiles_per_chunk
    act_map = lambda c, i: (c * tpc + i, 0)      # activation tiles stream over N
    const_map = lambda c, i: (0, 0)              # DMA'd once, VMEM-resident

    emax = pl.pallas_call(
        _reader_max_kernel,
        out_shape=jax.ShapeDtypeStruct((num_chunks, 1, g_pad), jnp.float32),
        grid_spec=pltpu.PrefetchScalarGridSpec(
            num_scalar_prefetch=0,
            grid=(num_chunks, tiles_per_chunk),
            in_specs=[
                pl.BlockSpec((tile_n, H), act_map),          # entity embeddings
                pl.BlockSpec((tile_n, 1), act_map),          # sentence ids
                pl.BlockSpec((tile_n, 1), act_map),          # group ids
                pl.BlockSpec((H, d1_pad), const_map),        # W1 (entity half)
                pl.BlockSpec((s_pad, d1_pad), const_map),    # mask projection (+ b1)
                pl.BlockSpec((1, d1_pad), const_map),        # W2 as a row
                pl.BlockSpec((1, 1), const_map),             # b2
            ],
            out_specs=pl.BlockSpec((1, 1, g_pad), lambda c, i: (c, 0, 0)),
        ),
        compiler_params=pltpu.CompilerParams(
            dimension_semantics=("parallel", "arbitrary"),
            vmem_limit_bytes=32 * 1024 * 1024),
    )(e_p, sid_p.reshape(n_pad, 1), gid_p.reshape(n_pad, 1), w1a, mproj, w2row, b2p)

    # Fold per-chunk partial maxima (trivial; this is what lets v7x use both TCs).
    return jnp.max(emax[:, 0, :], axis=0)[:num_groups]


if __name__ == "__main__":
    key = jax.random.PRNGKey(0)

    # Small, module-consistent shapes (real model: H=768, D1=100, S~tens, N~tens-hundreds).
    S, L, H = 4, 16, 32          # sentences, seq len, hidden
    D1 = 100                     # nn.Linear(2*768, 100)
    N = 10                       # total @entity occurrences across sentences
    G = 4                        # number of unique entity strings

    k_bert, k_w1, k_b1, k_w2, k_b2, k_sid, k_tid, k_mid, k_gid = jax.random.split(key, 9)

    # TODO(synk): the pretrained SciBERT encoder + tokenizer have no Pallas equivalent;
    # bert_out is a synthetic stand-in for self.bert(combined_input)[0][-1].
    bert_out = jax.random.normal(k_bert, (S, L, H), dtype=jnp.float32)

    # Entity occurrences: owning sentence, token position, unique-entity group id.
    sent_ids = jax.random.randint(k_sid, (N,), 0, S)
    tok_ids = jax.random.randint(k_tid, (N,), 1, L)
    mask_pos = jax.random.randint(k_mid, (S,), 1, L)      # [MASK] position per sentence
    group_ids = jax.random.randint(k_gid, (N,), 0, G)

    # Head parameters (nn.Linear(2H, D1), nn.Linear(D1, 1)).
    w1 = jax.random.normal(k_w1, (2 * H, D1), dtype=jnp.float32) * 0.05
    b1 = jax.random.normal(k_b1, (D1,), dtype=jnp.float32) * 0.05
    w2 = jax.random.normal(k_w2, (D1, 1), dtype=jnp.float32) * 0.05
    b2 = jax.random.normal(k_b2, (1,), dtype=jnp.float32) * 0.05

    # ---- reference (pure JAX, f32) ----
    ent_vecs = bert_out[sent_ids, tok_ids, :]              # [N, H]
    msk_vecs = bert_out[sent_ids, mask_pos[sent_ids], :]   # [N, H] (expand_as equivalent)
    x = jnp.concatenate([ent_vecs, msk_vecs], axis=-1)
    ref_scores = jnp.maximum(x @ w1 + b1, 0.0) @ w2 + b2                  # [N, 1]
    ref_emax = jax.ops.segment_max(ref_scores[:, 0], group_ids, num_segments=G)
    ref_emax = jnp.where(jnp.isfinite(ref_emax), ref_emax, NEG_INF)

    run = functools.partial(scibert_reader_max, bert_out, sent_ids, tok_ids, mask_pos,
                            group_ids, G, w1, b1, w2, b2)

    # Exact-ish f32 path, single chunk (v5e/v6e-style config).
    emax_f32 = jax.block_until_ready(run(input_dtype=jnp.float32, num_chunks=1))
    assert jnp.allclose(emax_f32, ref_emax, atol=2e-4, rtol=2e-4), "f32 entity max mismatch"

    # Default path: bf16 activations / W1a, device-dependent num_chunks.
    emax_def = jax.block_until_ready(run())
    assert jnp.allclose(emax_def, ref_emax, atol=3e-2, rtol=3e-2), "bf16 entity max mismatch"

    # Explicit 2-chunk (v7x-style) config to exercise the parallel partial-max fold.
    emax_2c = jax.block_until_ready(run(num_chunks=2))
    assert jnp.allclose(emax_2c, ref_emax, atol=3e-2, rtol=3e-2), "2-chunk entity max mismatch"

    print("KERNEL_OK")
</pallas_src>

<mosaic_0001>
module attributes {stable_mosaic.version = 11 : i64} {
  func.func @_reader_max_kernel(%arg0: i32, %arg1: i32, %arg2: memref<16x32xf32, #tpu.memory_space<vmem>>, %arg3: memref<16x1xi32, #tpu.memory_space<vmem>>, %arg4: memref<16x1xi32, #tpu.memory_space<vmem>>, %arg5: memref<32x128xf32, #tpu.memory_space<vmem>>, %arg6: memref<128x128xf32, #tpu.memory_space<vmem>>, %arg7: memref<1x128xf32, #tpu.memory_space<vmem>>, %arg8: memref<1x1xf32, #tpu.memory_space<vmem>>, %arg9: memref<1x1x128xf32, #tpu.memory_space<vmem>>) attributes {dimension_semantics = [#tpu.dimension_semantics<parallel>, #tpu.dimension_semantics<arbitrary>], iteration_bounds = array<i64: 1, 1>, scalar_prefetch = 0 : i64, scratch_operands = 0 : i64, tpu.core_type = #tpu.core_type<tc>, window_params = [{transform_indices = @transform_0, window_bounds = array<i64: 16, 32>}, {transform_indices = @transform_1, window_bounds = array<i64: 16, 1>}, {transform_indices = @transform_2, window_bounds = array<i64: 16, 1>}, {pipeline_mode = #tpu.pipeline_mode<synchronous>, transform_indices = @transform_3, window_bounds = array<i64: 32, 128>}, {pipeline_mode = #tpu.pipeline_mode<synchronous>, transform_indices = @transform_4, window_bounds = array<i64: 128, 128>}, {pipeline_mode = #tpu.pipeline_mode<synchronous>, transform_indices = @transform_5, window_bounds = array<i64: 1, 128>}, {pipeline_mode = #tpu.pipeline_mode<synchronous>, transform_indices = @transform_6, window_bounds = array<i64: 1, 1>}, {transform_indices = @transform_7, window_bounds = array<i64: 1, 1, 128>}]} {
    %c0_i32 = arith.constant 0 : i32
    %0 = arith.cmpi eq, %arg1, %c0_i32 : i32
    %1 = arith.extui %0 : i1 to i32
    %c0_i32_0 = arith.constant 0 : i32
    %2 = arith.cmpi ne, %1, %c0_i32_0 : i32
    scf.if %2 {
      %cst_25 = arith.constant -1.000000e+30 : f32
      %39 = vector.broadcast %cst_25 : f32 to vector<1x1x128xf32>
      %c0_26 = arith.constant 0 : index
      %c0_27 = arith.constant 0 : index
      %c0_28 = arith.constant 0 : index
      %40 = vector.load %arg9[%c0_26, %c0_27, %c0_28] : memref<1x1x128xf32, #tpu.memory_space<vmem>>, vector<1x1x128xf32>
      tpu.vector_store %arg9[%c0_26, %c0_27, %c0_28], %39 {strides = array<i32>} : memref<1x1x128xf32, #tpu.memory_space<vmem>>, vector<1x1x128xf32>,
    } else {
    }
    %c0 = arith.constant 0 : index
    %c0_1 = arith.constant 0 : index
    %3 = vector.load %arg2[%c0, %c0_1] : memref<16x32xf32, #tpu.memory_space<vmem>>, vector<16x32xf32>
    %c0_2 = arith.constant 0 : index
    %c0_3 = arith.constant 0 : index
    %4 = vector.load %arg5[%c0_2, %c0_3] : memref<32x128xf32, #tpu.memory_space<vmem>>, vector<32x128xf32>
    %cst = arith.constant dense<0.000000e+00> : vector<16x128xf32>
    %5 = tpu.matmul %3, %4, %cst {dimension_numbers = #tpu.dot_dimension_numbers<[1], [0], [0], [1], [0, 0, 1, 1], [], []>} : vector<16x32xf32>, vector<32x128xf32>, vector<16x128xf32> -> vector<16x128xf32>
    %c0_4 = arith.constant 0 : index
    %c0_5 = arith.constant 0 : index
    %6 = vector.load %arg3[%c0_4, %c0_5] : memref<16x1xi32, #tpu.memory_space<vmem>>, vector<16x1xi32>
    %7 = tpu.iota {dimensions = array<i32: 1>} : vector<16x128xi32>
    %8 = vector.broadcast %6 : vector<16x1xi32> to vector<16x128xi32>
    %9 = arith.cmpi eq, %7, %8 : vector<16x128xi32>
    %10 = arith.extui %9 : vector<16x128xi1> to vector<16x128xi32>
    %11 = arith.sitofp %10 : vector<16x128xi32> to vector<16x128xf32>
    %c0_6 = arith.constant 0 : index
    %c0_7 = arith.constant 0 : index
    %12 = vector.load %arg6[%c0_6, %c0_7] : memref<128x128xf32, #tpu.memory_space<vmem>>, vector<128x128xf32>
    %cst_8 = arith.constant dense<0.000000e+00> : vector<16x128xf32>
    %13 = tpu.matmul %11, %12, %cst_8 {dimension_numbers = #tpu.dot_dimension_numbers<[1], [0], [0], [1], [0, 0, 1, 1], [], []>} : vector<16x128xf32>, vector<128x128xf32>, vector<16x128xf32> -> vector<16x128xf32>
    %14 = arith.addf %5, %13 : vector<16x128xf32>
    %cst_9 = arith.constant 0.000000e+00 : f32
    %15 = vector.broadcast %cst_9 : f32 to vector<16x128xf32>
    %16 = arith.maximumf %14, %15 : vector<16x128xf32>
    %c0_10 = arith.constant 0 : index
    %c0_11 = arith.constant 0 : index
    %17 = vector.load %arg7[%c0_10, %c0_11] : memref<1x128xf32, #tpu.memory_space<vmem>>, vector<1x128xf32>
    %18 = vector.broadcast %17 : vector<1x128xf32> to vector<16x128xf32>
    %19 = arith.mulf %16, %18 : vector<16x128xf32>
    %cst_12 = arith.constant dense<0.000000e+00> : vector<16xf32>
    %20 = vector.multi_reduction <add>, %19, %cst_12 [1] : vector<16x128xf32> to vector<16xf32>
    %21 = vector.shape_cast %20 : vector<16xf32> to vector<16x1xf32>
    %c0_13 = arith.constant 0 : index
    %c0_14 = arith.constant 0 : index
    %22 = vector.load %arg8[%c0_13, %c0_14] : memref<1x1xf32, #tpu.memory_space<vmem>>, vector<1x1xf32>
    %23 = vector.broadcast %22 : vector<1x1xf32> to vector<16x1xf32>
    %24 = arith.addf %21, %23 : vector<16x1xf32>
    %c0_15 = arith.constant 0 : index
    %c0_16 = arith.constant 0 : index
    %25 = vector.load %arg4[%c0_15, %c0_16] : memref<16x1xi32, #tpu.memory_space<vmem>>, vector<16x1xi32>
    %26 = tpu.iota {dimensions = array<i32: 1>} : vector<16x128xi32>
    %27 = vector.broadcast %25 : vector<16x1xi32> to vector<16x128xi32>
    %28 = arith.cmpi eq, %26, %27 : vector<16x128xi32>
    %cst_17 = arith.constant -1.000000e+30 : f32
    %29 = vector.shape_cast %24 : vector<16x1xf32> to vector<16x1xf32>
    %30 = vector.broadcast %29 : vector<16x1xf32> to vector<16x128xf32>
    %31 = vector.broadcast %cst_17 : f32 to vector<16x128xf32>
    %32 = arith.select %28, %30, %31 : vector<16x128xi1>, vector<16x128xf32>
    %cst_18 = arith.constant dense<0xFF800000> : vector<128xf32>
    %33 = vector.multi_reduction <maximumf>, %32, %cst_18 [0] : vector<16x128xf32> to vector<128xf32>
    %34 = vector.shape_cast %33 : vector<128xf32> to vector<1x128xf32>
    %c0_19 = arith.constant 0 : index
    %c0_20 = arith.constant 0 : index
    %c0_21 = arith.constant 0 : index
    %35 = vector.load %arg9[%c0_19, %c0_20, %c0_21] : memref<1x1x128xf32, #tpu.memory_space<vmem>>, vector<1x1x128xf32>
    %36 = vector.shape_cast %34 : vector<1x128xf32> to vector<1x1x128xf32>
    %37 = arith.maximumf %35, %36 : vector<1x1x128xf32>
    %c0_22 = arith.constant 0 : index
    %c0_23 = arith.constant 0 : index
    %c0_24 = arith.constant 0 : index
    %38 = vector.load %arg9[%c0_22, %c0_23, %c0_24] : memref<1x1x128xf32, #tpu.memory_space<vmem>>, vector<1x1x128xf32>
    tpu.vector_store %arg9[%c0_22, %c0_23, %c0_24], %37 {strides = array<i32>} : memref<1x1x128xf32, #tpu.memory_space<vmem>>, vector<1x1x128xf32>,
    return
  }
  func.func @transform_0(%arg0: i32, %arg1: i32) -> (i32, i32) {
    %c1_i32 = arith.constant 1 : i32
    %0 = arith.muli %arg0, %c1_i32 : i32
    %1 = arith.addi %0, %arg1 : i32
    %c0_i32 = arith.constant 0 : i32
    %c0_i32_0 = arith.constant 0 : i32
    return %1, %c0_i32 : i32, i32
  }
  func.func @transform_1(%arg0: i32, %arg1: i32) -> (i32, i32) {
    %c1_i32 = arith.constant 1 : i32
    %0 = arith.muli %arg0, %c1_i32 : i32
    %1 = arith.addi %0, %arg1 : i32
    %c0_i32 = arith.constant 0 : i32
    %c0_i32_0 = arith.constant 0 : i32
    return %1, %c0_i32 : i32, i32
  }
  func.func @transform_2(%arg0: i32, %arg1: i32) -> (i32, i32) {
    %c1_i32 = arith.constant 1 : i32
    %0 = arith.muli %arg0, %c1_i32 : i32
    %1 = arith.addi %0, %arg1 : i32
    %c0_i32 = arith.constant 0 : i32
    %c0_i32_0 = arith.constant 0 : i32
    return %1, %c0_i32 : i32, i32
  }
  func.func @transform_3(%arg0: i32, %arg1: i32) -> (i32, i32) {
    %c0_i32 = arith.constant 0 : i32
    %c0_i32_0 = arith.constant 0 : i32
    %c0_i32_1 = arith.constant 0 : i32
    return %c0_i32, %c0_i32_0 : i32, i32
  }
  func.func @transform_4(%arg0: i32, %arg1: i32) -> (i32, i32) {
    %c0_i32 = arith.constant 0 : i32
    %c0_i32_0 = arith.constant 0 : i32
    %c0_i32_1 = arith.constant 0 : i32
    return %c0_i32, %c0_i32_0 : i32, i32
  }
  func.func @transform_5(%arg0: i32, %arg1: i32) -> (i32, i32) {
    %c0_i32 = arith.constant 0 : i32
    %c0_i32_0 = arith.constant 0 : i32
    %c0_i32_1 = arith.constant 0 : i32
    return %c0_i32, %c0_i32_0 : i32, i32
  }
  func.func @transform_6(%arg0: i32, %arg1: i32) -> (i32, i32) {
    %c0_i32 = arith.constant 0 : i32
    %c0_i32_0 = arith.constant 0 : i32
    %c0_i32_1 = arith.constant 0 : i32
    return %c0_i32, %c0_i32_0 : i32, i32
  }
  func.func @transform_7(%arg0: i32, %arg1: i32) -> (i32, i32, i32) {
    %c0_i32 = arith.constant 0 : i32
    %c0_i32_0 = arith.constant 0 : i32
    %c0_i32_1 = arith.constant 0 : i32
    return %arg0, %c0_i32, %c0_i32_0 : i32, i32, i32
  }
}

</mosaic_0001>

<llo_original>
// kernel: tpu_custom_call.1
$region0: #{tpu_custom_call.1}
  #allocation0 [shape = 'u32[]', space=smem, size = 0x4, offset = 0x4, fixed_abs, tag = 'smem constant byte address 0x4 - core index']
  #allocation1 [shape = 'u32[144,128]{1,0:T(1,128)}', space=vmem, size = 0x12000, scoped, tag = 'internal scratch']
  #allocation2 [shape = 'f32[1,1]{1,0:T(1,128)S(1)}', space=vmem, size = 0x200, scoped, tag = 'scoped memory for tpu_custom_call.1']
  %s0 = inlined_call_operand.vmem [shape: f32[16,32], index: 0, kind: input, shape index: {}]
  %s1 = inlined_call_operand.vmem [shape: s32[16,1], index: 1, kind: input, shape index: {}]
  %s2 = inlined_call_operand.vmem [shape: s32[16,1], index: 2, kind: input, shape index: {}]
  %s3 = inlined_call_operand.vmem [shape: f32[32,128], index: 3, kind: input, shape index: {}]
  %s4 = inlined_call_operand.hbm [shape: f32[128,128], index: 4, kind: input, shape index: {}]
  %s5 = inlined_call_operand.vmem [shape: f32[1,128], index: 5, kind: input, shape index: {}]
  %s6 = inlined_call_operand.<no memory space> [shape: f32[1,1], index: 6, kind: input, shape index: {}]
  %s7 = inlined_call_operand.hbm [shape: f32[1,1,128], index: 7, kind: output, shape index: {}]
  %s8 = sld [smem:[#allocation0]]
  $region46: #{tpu_custom_call.1} parent=0
    _
  %s10 = ssub.s32 1, %s8
  %s11 = scalar_select 0, %s10, %s8
  %v12 = vstv %s6
  %13 = vst [vmem:[#allocation2] sm:$0x1] %v12
  $region1: #{tpu_custom_call.1} parent=0
    #allocation3 [shape = 'u8[65536]{0}', space=vmem, size = 0x10000, scoped, tag = 'input window, operand 4, single buffered']
    #allocation4 [shape = 's32[1]{0}', space=sflag, size = 0x4, scoped, tag = 'scoped memory for tpu_custom_call.1']
    #allocation5 [shape = 's32[1]{0}', space=sflag, size = 0x4, scoped, tag = 'scoped memory for tpu_custom_call.1']
    #allocation6 [shape = 'u8[512]{0}', space=vmem, size = 0x400, scoped, tag = 'output window, operand 0, single buffered']
    %14 = vsyncpa [#allocation4], 0
    %15 = vsyncpa [#allocation5], 0
    // Predicated region
    $region2: #{tpu_custom_call.1} parent=1 // pred_check
      _
    $region3: #{tpu_custom_call.1} parent=1 // pred_check_branch
      %17 = sbr.rel (0) target = $region5
    $region4: #{tpu_custom_call.1} parent=1 // pred_region
      %s18 = sadd.s32 0, 0
      %s19 = smul.u32 2, %s18
      %p20 = scmp.lt.s32.totalorder %s19, 1
      %s21 = scalar_select %p20, %s19, 1
      %s22 = smul.addr %s21, 8
      %s23 = scalar_lea.vmem %s0, %s22
      %s24 = sadd.s32 0, 0
      %s25 = smul.u32 2, %s24
    $region5: #{tpu_custom_call.1} parent=1 // pred_fallthru
      _
    // Predicated region
    $region6: #{tpu_custom_call.1} parent=1 // pred_check
      _
    $region7: #{tpu_custom_call.1} parent=1 // pred_check_branch
      %27 = sbr.rel (0) target = $region9
    $region8: #{tpu_custom_call.1} parent=1 // pred_region
      %s28 = sadd.s32 0, 0
      %s29 = smul.u32 2, %s28
      %p30 = scmp.lt.s32.totalorder %s29, 1
      %s31 = scalar_select %p30, %s29, 1
      %s32 = smul.addr %s31, 8
      %s33 = scalar_lea.vmem %s1, %s32
      %s34 = sadd.s32 0, 0
      %s35 = smul.u32 2, %s34
    $region9: #{tpu_custom_call.1} parent=1 // pred_fallthru
      _
    // Predicated region
    $region10: #{tpu_custom_call.1} parent=1 // pred_check
      _
    $region11: #{tpu_custom_call.1} parent=1 // pred_check_branch
      %37 = sbr.rel (0) target = $region13
    $region12: #{tpu_custom_call.1} parent=1 // pred_region
      %s38 = sadd.s32 0, 0
      %s39 = smul.u32 2, %s38
      %p40 = scmp.lt.s32.totalorder %s39, 1
      %s41 = scalar_select %p40, %s39, 1
      %s42 = smul.addr %s41, 8
      %s43 = scalar_lea.vmem %s2, %s42
      %s44 = sadd.s32 0, 0
      %s45 = smul.u32 2, %s44
    $region13: #{tpu_custom_call.1} parent=1 // pred_fallthru
      _
    // Predicated region
    $region14: #{tpu_custom_call.1} parent=1 // pred_check
      _
    $region15: #{tpu_custom_call.1} parent=1 // pred_check_branch
      %47 = sbr.rel (0) target = $region17
    $region16: #{tpu_custom_call.1} parent=1 // pred_region
      _
    $region17: #{tpu_custom_call.1} parent=1 // pred_fallthru
      _
    // Predicated region
    $region18: #{tpu_custom_call.1} parent=1 // pred_check
      _
    $region19: #{tpu_custom_call.1} parent=1 // pred_check_branch
      %49 = sbr.rel (0) target = $region21
    $region20: #{tpu_custom_call.1} parent=1 // pred_region
      %s51 = ssub.s32 2048, 2048
      %52 = vsyncadd [#allocation4], %s51
      %s53 = sshll.u32 [#allocation3], 4
      %s54 = int_to_ptr.vmem [resolvable:$true] %s53
      %59 = dma.hbm_to_vmem [thread:$0]  %s4, 2048, %s54, [#allocation4], 128, 128, 8
    $region21: #{tpu_custom_call.1} parent=1 // pred_fallthru
      _
    // Predicated region
    $region22: #{tpu_custom_call.1} parent=1 // pred_check
      _
    $region23: #{tpu_custom_call.1} parent=1 // pred_check_branch
      %61 = sbr.rel (0) target = $region25
    $region24: #{tpu_custom_call.1} parent=1 // pred_region
      _
    $region25: #{tpu_custom_call.1} parent=1 // pred_fallthru
      _
    // Predicated region
    $region26: #{tpu_custom_call.1} parent=1 // pred_check
      _
    $region27: #{tpu_custom_call.1} parent=1 // pred_check_branch
      %63 = sbr.rel (0) target = $region29
    $region28: #{tpu_custom_call.1} parent=1 // pred_region
      _
    $region29: #{tpu_custom_call.1} parent=1 // pred_fallthru
      _
    // Predicated region
    $region30: #{tpu_custom_call.1} parent=1 // pred_check
      _
    $region31: #{tpu_custom_call.1} parent=1 // pred_check_branch
      %65 = sbr.rel (0) target = $region33
    $region32: #{tpu_custom_call.1} parent=1 // pred_region
      %66 = dma.done [#allocation4], 2048
    $region33: #{tpu_custom_call.1} parent=1 // pred_fallthru
      _
    %s67 = sadd.s32 0, 0
    %s68 = smul.u32 2, %s67
    %p69 = scmp.lt.s32.totalorder %s68, 1
    %s70 = scalar_select %p69, %s68, 1
    %s71 = smul.addr %s70, 8
    %s72 = scalar_lea.vmem %s0, %s71
    %s73 = sadd.s32 0, 0
    %s74 = smul.u32 2, %s73
    %p75 = scmp.lt.s32.totalorder %s74, 1
    %s76 = scalar_select %p75, %s74, 1
    %s77 = smul.addr %s76, 8
    %s78 = scalar_lea.vmem %s1, %s77
    %s79 = sadd.s32 0, 0
    %s80 = smul.u32 2, %s79
    %p81 = scmp.lt.s32.totalorder %s80, 1
    %s82 = scalar_select %p81, %s80, 1
    %s83 = smul.addr %s82, 8
    %s84 = scalar_lea.vmem %s2, %s83
    %s85 = sadd.s32 0, 0
    %s86 = smul.u32 2, %s85
    %p87 = scmp.lt.s32.totalorder %s86, 1
    %s88 = scalar_select %p87, %s86, 1
    %s89 = smul.addr %s88, 8
    %s90 = scalar_lea.vmem %s0, %s89
    %s91 = sadd.s32 0, 0
    %s92 = smul.u32 2, %s91
    %s93 = sadd.s32 0, 0
    %s94 = smul.u32 2, %s93
    %p95 = scmp.lt.s32.totalorder %s94, 1
    %s96 = scalar_select %p95, %s94, 1
    %s97 = smul.addr %s96, 8
    %s98 = scalar_lea.vmem %s1, %s97
    %s99 = sadd.s32 0, 0
    %s100 = smul.u32 2, %s99
    %s101 = sadd.s32 0, 0
    %s102 = smul.u32 2, %s101
    %p103 = scmp.lt.s32.totalorder %s102, 1
    %s104 = scalar_select %p103, %s102, 1
    %s105 = smul.addr %s104, 8
    %s106 = scalar_lea.vmem %s2, %s105
    %s107 = sadd.s32 0, 0
    %s108 = smul.u32 2, %s107
    %p109 = scmp.eq.s32.totalorder 0, 0
    // Predicated region
    $region34: #{tpu_custom_call.1} parent=1 // pred_check
      %p110 = pneg %p109
    $region35: #{tpu_custom_call.1} parent=1 // pred_check_branch
      %112 = sbr.rel (%p110) target = $region37
    $region36: #{tpu_custom_call.1} parent=1 // pred_region
      %113 = vst [vmem:[#allocation6] sm:$0x1] -1e+30
    $region37: #{tpu_custom_call.1} parent=1 // pred_fallthru
      _
    %v114 = vld [vmem:[%s90] sm:$0xff]
    %v115 = vld [vmem:[%s90 + $0x8] sm:$0xff]
    %v116 = vld [vmem:[%s3] sm:$0xff]
    %v117 = vld [vmem:[%s3 + $0x8] sm:$0xff]
    %v118 = vld [vmem:[%s3 + $0x10] sm:$0xff]
    %v119 = vld [vmem:[%s3 + $0x18] sm:$0xff]
    %v120 = vld [vmem:[%s98] sm:$0xff]
    %v121 = vld [vmem:[%s98 + $0x8] sm:$0xff]
    %v122 = vlaneseq
    %v123 = vand.u32 %v122, 127
    %124 = vset.pattern.permute.xlu0 0
    %125 = vperm.xlu0 %124, %v120
    %v126 = vpop.permute.xlu0 %125
    %127 = vset.pattern.permute.xlu0 0
    %128 = vperm.xlu0 %127, %v121
    %v129 = vpop.permute.xlu0 %128
    %vm130 = vcmp.eq.s32.totalorder %v123, %v126
    %vm131 = vcmp.eq.s32.totalorder %v123, %v129
    %v132 = vsel %vm130, 1, 0
    %v133 = vsel %vm131, 1, 0
    %v134 = vcvt.s32.f32 %v132
    %v135 = vcvt.s32.f32 %v133
    %v136 = vld [vmem:[#allocation3] sm:$0xff]
    %v137 = vld [vmem:[#allocation3 + $0x8] sm:$0xff]
    %v138 = vld [vmem:[#allocation3 + $0x10] sm:$0xff]
    %v139 = vld [vmem:[#allocation3 + $0x18] sm:$0xff]
    %v140 = vld [vmem:[#allocation3 + $0x20] sm:$0xff]
    %v141 = vld [vmem:[#allocation3 + $0x28] sm:$0xff]
    %v142 = vld [vmem:[#allocation3 + $0x30] sm:$0xff]
    %v143 = vld [vmem:[#allocation3 + $0x38] sm:$0xff]
    %v144 = vld [vmem:[#allocation3 + $0x40] sm:$0xff]
    %v145 = vld [vmem:[#allocation3 + $0x48] sm:$0xff]
    %v146 = vld [vmem:[#allocation3 + $0x50] sm:$0xff]
    %v147 = vld [vmem:[#allocation3 + $0x58] sm:$0xff]
    %v148 = vld [vmem:[#allocation3 + $0x60] sm:$0xff]
    %v149 = vld [vmem:[#allocation3 + $0x68] sm:$0xff]
    %v150 = vld [vmem:[#allocation3 + $0x70] sm:$0xff]
    %v151 = vld [vmem:[#allocation3 + $0x78] sm:$0xff]
    %152 = vmatprep.subr.mxu0 0.0
    %153 = vmatpush1.msra.mxu0 %v136
    %154 = vmatprep.subr.mxu0 0.0
    %155 = vmatpush1.msra.mxu0 %v137
    %156 = vmatprep.subr.mxu0 0.0
    %157 = vmatpush1.msra.mxu0 %v138
    %158 = vmatprep.subr.mxu0 0.0
    %159 = vmatpush1.msra.mxu0 %v139
    %160 = vmatprep.subr.mxu0 0.0
    %161 = vmatpush1.msra.mxu0 %v140
    %162 = vmatprep.subr.mxu0 0.0
    %163 = vmatpush1.msra.mxu0 %v141
    %164 = vmatprep.subr.mxu0 0.0
    %165 = vmatpush1.msra.mxu0 %v142
    %166 = vmatprep.subr.mxu0 0.0
    %167 = vmatpush1.msra.mxu0 %v143
    %168 = vmatprep.subr.mxu0 0.0
    %169 = vmatpush1.msra.mxu0 %v144
    %170 = vmatprep.subr.mxu0 0.0
    %171 = vmatpush1.msra.mxu0 %v145
    %172 = vmatprep.subr.mxu0 0.0
    %173 = vmatpush1.msra.mxu0 %v146
    %174 = vmatprep.subr.mxu0 0.0
    %175 = vmatpush1.msra.mxu0 %v147
    %176 = vmatprep.subr.mxu0 0.0
    %177 = vmatpush1.msra.mxu0 %v148
    %178 = vmatprep.subr.mxu0 0.0
    %179 = vmatpush1.msra.mxu0 %v149
    %180 = vmatprep.subr.mxu0 0.0
    %181 = vmatpush1.msra.mxu0 %v150
    %182 = vmatprep.subr.mxu0 0.0
    %183 = vmatpush1.msra.mxu0 %v151
    %184 = vmatprep.subr.mxu0 0.0
    %185 = vmatpush1.msra.mxu0 0.0
    %186 = vmatprep.subr.mxu0 0.0
    %187 = vmatpush1.msra.mxu0 0.0
    %188 = vmatprep.subr.mxu0 0.0
    %189 = vmatpush1.msra.mxu0 0.0
    %190 = vmatprep.subr.mxu0 0.0
    %191 = vmatpush1.msra.mxu0 0.0
    %192 = vmatprep.subr.mxu0 0.0
    %193 = vmatpush1.msra.mxu0 0.0
    %194 = vmatprep.subr.mxu0 0.0
    %195 = vmatpush1.msra.mxu0 0.0
    %196 = vmatprep.subr.mxu0 0.0
    %197 = vmatpush1.msra.mxu0 0.0
    %198 = vmatprep.subr.mxu0 0.0
    %199 = vmatpush1.msra.mxu0 0.0
    %200 = vmatprep.subr.mxu0 0.0
    %201 = vmatpush1.msra.mxu0 0.0
    %202 = vmatprep.subr.mxu0 0.0
    %203 = vmatpush1.msra.mxu0 0.0
    %204 = vmatprep.subr.mxu0 0.0
    %205 = vmatpush1.msra.mxu0 0.0
    %206 = vmatprep.subr.mxu0 0.0
    %207 = vmatpush1.msra.mxu0 0.0
    %208 = vmatprep.subr.mxu0 0.0
    %209 = vmatpush1.msra.mxu0 0.0
    %210 = vmatprep.subr.mxu0 0.0
    %211 = vmatpush1.msra.mxu0 0.0
    %212 = vmatprep.subr.mxu0 0.0
    %213 = vmatpush1.msra.mxu0 0.0
    %214 = vmatprep.subr.mxu0 0.0
    %215 = vmatpush1.msra.mxu0 0.0
    %216 = vmatprep.mubr.f32.mxu0 0.0
    %217 = vmatmul.mubr.f32.gmra.mrb[0].mxu0 %v134
    %v218 = vpop.f32.mrb[0].mxu0
    %v219 = vadd.f32 0.0, %v218
    %v220 = vpop.f32.mrb[0].mxu0
    %221 = vmatprep.mubr.f32.mxu0 0.0
    %222 = vmatmul.mubr.f32.gmra.mrb[0].mxu0 %v135
    %v223 = vpop.f32.mrb[0].mxu0
    %v224 = vadd.f32 0.0, %v223
    %v225 = vpop.f32.mrb[0].mxu0
    %226 = vdwg.mxu0
    %vm227 = vcmask 261120
    %v229 = vsel %vm227, %v114, 0
    %v232 = vsel %vm227, %v115, 0
    %234 = vmatprep.subr.mxu0 0.0
    %235 = vmatpush1.msra.mxu0 %v116
    %236 = vmatprep.subr.mxu0 0.0
    %237 = vmatpush1.msra.mxu0 %v117
    %238 = vmatprep.subr.mxu0 0.0
    %239 = vmatpush1.msra.mxu0 %v118
    %240 = vmatprep.subr.mxu0 0.0
    %241 = vmatpush1.msra.mxu0 %v119
    %242 = vmatprep.subr.mxu0 0.0
    %243 = vmatpush1.msra.mxu0 0.0
    %244 = vmatprep.subr.mxu0 0.0
    %245 = vmatpush1.msra.mxu0 0.0
    %246 = vmatprep.subr.mxu0 0.0
    %247 = vmatpush1.msra.mxu0 0.0
    %248 = vmatprep.subr.mxu0 0.0
    %249 = vmatpush1.msra.mxu0 0.0
    %250 = vmatprep.subr.mxu0 0.0
    %251 = vmatpush1.msra.mxu0 0.0
    %252 = vmatprep.subr.mxu0 0.0
    %253 = vmatpush1.msra.mxu0 0.0
    %254 = vmatprep.subr.mxu0 0.0
    %255 = vmatpush1.msra.mxu0 0.0
    %256 = vmatprep.subr.mxu0 0.0
    %257 = vmatpush1.msra.mxu0 0.0
    %258 = vmatprep.subr.mxu0 0.0
    %259 = vmatpush1.msra.mxu0 0.0
    %260 = vmatprep.subr.mxu0 0.0
    %261 = vmatpush1.msra.mxu0 0.0
    %262 = vmatprep.subr.mxu0 0.0
    %263 = vmatpush1.msra.mxu0 0.0
    %264 = vmatprep.subr.mxu0 0.0
    %265 = vmatpush1.msra.mxu0 0.0
    %266 = vmatprep.subr.mxu0 0.0
    %267 = vmatpush1.msra.mxu0 0.0
    %268 = vmatprep.subr.mxu0 0.0
    %269 = vmatpush1.msra.mxu0 0.0
    %270 = vmatprep.subr.mxu0 0.0
    %271 = vmatpush1.msra.mxu0 0.0
    %272 = vmatprep.subr.mxu0 0.0
    %273 = vmatpush1.msra.mxu0 0.0
    %274 = vmatprep.subr.mxu0 0.0
    %275 = vmatpush1.msra.mxu0 0.0
    %276 = vmatprep.subr.mxu0 0.0
    %277 = vmatpush1.msra.mxu0 0.0
    %278 = vmatprep.subr.mxu0 0.0
    %279 = vmatpush1.msra.mxu0 0.0
    %280 = vmatprep.subr.mxu0 0.0
    %281 = vmatpush1.msra.mxu0 0.0
    %282 = vmatprep.subr.mxu0 0.0
    %283 = vmatpush1.msra.mxu0 0.0
    %284 = vmatprep.subr.mxu0 0.0
    %285 = vmatpush1.msra.mxu0 0.0
    %286 = vmatprep.subr.mxu0 0.0
    %287 = vmatpush1.msra.mxu0 0.0
    %288 = vmatprep.subr.mxu0 0.0
    %289 = vmatpush1.msra.mxu0 0.0
    %290 = vmatprep.subr.mxu0 0.0
    %291 = vmatpush1.msra.mxu0 0.0
    %292 = vmatprep.subr.mxu0 0.0
    %293 = vmatpush1.msra.mxu0 0.0
    %294 = vmatprep.subr.mxu0 0.0
    %295 = vmatpush1.msra.mxu0 0.0
    %296 = vmatprep.subr.mxu0 0.0
    %297 = vmatpush1.msra.mxu0 0.0
    %298 = vmatprep.mubr.f32.mxu0 0.0
    %299 = vmatmul.mubr.f32.gmra.mrb[0].mxu0 %v229
    %v300 = vpop.f32.mrb[0].mxu0
    %v301 = vadd.f32 %v219, %v300
    %v302 = vpop.f32.mrb[0].mxu0
    %303 = vmatprep.mubr.f32.mxu0 0.0
    %304 = vmatmul.mubr.f32.gmra.mrb[0].mxu0 %v232
    %v305 = vpop.f32.mrb[0].mxu0
    %v306 = vadd.f32 %v224, %v305
    %v307 = vpop.f32.mrb[0].mxu0
    %308 = vdwg.mxu0
    %v309 = vmax.f32 %v301, 0.0
    %v310 = vmax.f32 %v306, 0.0
    %v311 = vld [vmem:[%s5] sm:$0x1]
    %v313 = vlaneseq
    %v314 = vshrl.u32 %v313, 7
    %v315 = vsub.s32 0, %v314
    %v316 = vrot.slane %v311, %v315
    %v318 = vmul.f32 %v309, %v316
    %v319 = vmul.f32 %v310, %v316
    %320 = vadd.xlane.f32.xlu0 %v318
    %v321 = vpop.xlane.xlu0 %320
    %322 = vadd.xlane.f32.xlu0 %v319
    %v323 = vpop.xlane.xlu0 %322
    %v324 = vld [vmem:[#allocation2] sm:$0x1]
    %v326 = vlaneseq
    %v327 = vshrl.u32 %v326, 7
    %v328 = vsub.s32 0, %v327
    %v329 = vrot.slane %v324, %v328
    %v331 = vadd.f32 %v321, %v329
    %v332 = vadd.f32 %v323, %v329
    %v333 = vld [vmem:[%s106] sm:$0xff]
    %v334 = vld [vmem:[%s106 + $0x8] sm:$0xff]
    %335 = vset.pattern.permute.xlu0 0
    %336 = vperm.xlu0 %335, %v333
    %v337 = vpop.permute.xlu0 %336
    %338 = vset.pattern.permute.xlu0 0
    %339 = vperm.xlu0 %338, %v334
    %v340 = vpop.permute.xlu0 %339
    %vm341 = vcmp.eq.s32.totalorder %v123, %v337
    %vm342 = vcmp.eq.s32.totalorder %v123, %v340
    %344 = vset.pattern.permute.xlu0 0
    %345 = vperm.xlu0 %344, %v331
    %v346 = vpop.permute.xlu0 %345
    %349 = vset.pattern.permute.xlu0 0
    %350 = vperm.xlu0 %349, %v332
    %v351 = vpop.permute.xlu0 %350
    %v353 = vsel %vm341, %v346, -1e+30
    %v354 = vsel %vm342, %v351, -1e+30
    %v355 = vmax.f32 %v353, %v354
    %v356 = vrot.slane %v355, 4
    %v357 = vmax.f32 %v355, %v356
    %v358 = vrot.slane %v357, 2
    %v359 = vmax.f32 %v357, %v358
    %v360 = vrot.slane %v359, 1
    %v361 = vmax.f32 %v359, %v360
    %v362 = vld [vmem:[#allocation6] sm:$0x1]
    %v363 = vmax.f32 %v362, %v361
    %364 = vst [vmem:[#allocation6] sm:$0x1] %v363
    // Predicated region
    $region38: #{tpu_custom_call.1} parent=1 // pred_check
      _
    $region39: #{tpu_custom_call.1} parent=1 // pred_check_branch
      %366 = sbr.rel (0) target = $region41
    $region40: #{tpu_custom_call.1} parent=1 // pred_region
      %s368 = ssub.s32 16, 16
      %369 = vsyncadd [#allocation5], %s368
      %s371 = sshll.u32 [#allocation6], 4
      %s372 = int_to_ptr.vmem [resolvable:$true] %s371
      %374 = dma.vmem_to_hbm [thread:$0]  %s372, 16, %s7, [#allocation5]
    $region41: #{tpu_custom_call.1} parent=1 // pred_fallthru
      _
    // Predicated region
    $region42: #{tpu_custom_call.1} parent=1 // pred_check
      _
    $region43: #{tpu_custom_call.1} parent=1 // pred_check_branch
      %376 = sbr.rel (0) target = $region45
    $region44: #{tpu_custom_call.1} parent=1 // pred_region
      %377 = dma.done [#allocation5], 16
    $region45: #{tpu_custom_call.1} parent=1 // pred_fallthru
      _
    %378 = vsyncpa [#allocation4], 1
    %379 = vsyncpa [#allocation5], 1

</llo_original>
